<compile_context>
chip_gen: v6e
topology: v6e:2x2x1
jax: 0.10.0
libtpu: 0.0.40
codegen_flags: <defaults>
</compile_context>

<pallas_src>
import functools

import jax
import jax.numpy as jnp
from jax.experimental import pallas as pl
from jax.experimental.pallas import tpu as pltpu


def _round_up(v: int, m: int) -> int:
    return ((v + m - 1) // m) * m


def _dlinear_kernel(x_ref, ws_ref, beff_ref, o_ref):
    """Memory-bound ideal: mean-subtract (VPU, f32) + one GEMM (MXU, f32 acc) + bias."""
    f32 = jnp.float32
    x = x_ref[...].astype(f32)                        # [TN, S]
    row_mean = jnp.mean(x, axis=1, keepdims=True)     # [TN, 1], f32
    xs = (x - row_mean).astype(ws_ref.dtype)          # de-trended rows (GEMM operand dtype)
    seasonal = jnp.dot(xs, ws_ref[...], preferred_element_type=f32)   # [TN, Ppad]
    o_ref[...] = (seasonal + beff_ref[...].astype(f32)).astype(o_ref.dtype)


def prepare_dlinear_params(w_trend, b_trend, w_seasonal, b_seasonal,
                           *, compute_dtype=jnp.bfloat16):
    """One-time parameter preprocessing (call once, reuse across forwards).

    PyTorch stores Linear weights as [pred_len, seq_len]; the seasonal weight is
    pre-transposed to [seq_len, pred_len_padded] (pred_len zero-padded to a
    multiple of 128 for a lane-dense output) and pre-cast to `compute_dtype`
    (bf16 default: halves weight HBM/VMEM traffic, f32 accumulation stays).
    The trend weight/bias are kept in their original layout (f32) because the
    trend is a tiny XLA-side op folded into the kernel bias per call.
    """
    p, s = w_seasonal.shape
    assert w_trend.shape == (p, s)
    p_pad = _round_up(p, 128)

    ws_t = jnp.pad(jnp.transpose(w_seasonal).astype(compute_dtype),
                   ((0, 0), (0, p_pad - p)))                      # [S, Ppad]
    bs_pad = jnp.pad(b_seasonal.astype(jnp.float32),
                     (0, p_pad - p)).reshape(1, p_pad)            # [1, Ppad]
    wt = w_trend.astype(jnp.float32)                              # [P, S]
    bt = b_trend.astype(jnp.float32)                              # [P]
    return (wt, bt, ws_t, bs_pad), p


def _choose_row_tile(n: int, tile_n: int, min_grid_steps: int):
    """Row tile: multiple of 8 sublanes, capped so the grid has >= min_grid_steps
    steps when N allows it (v7x has 2 TensorCores; a 1-step grid idles one)."""
    tn = _round_up(max(8, min(tile_n, n)), 8)
    if min_grid_steps > 1:
        tn = min(tn, _round_up(max(8, pl.cdiv(n, min_grid_steps)), 8))
    n_pad = _round_up(n, tn)
    return tn, n_pad


def dlinear_apply(x, prepared_params, pred_len, *, tile_n=512,
                  min_grid_steps=2, out_dtype=None):
    """x: [input_dim, seq_len] with input_dim == seq_len. Returns [input_dim, pred_len]."""
    wt, bt, ws, bs = prepared_params
    n, s = x.shape
    assert n == s, "DLinear module requires input_dim == seq_len"
    s_w, p_pad = ws.shape
    assert s_w == s, "weight seq_len mismatch"
    p = wt.shape[0]
    out_dtype = x.dtype if out_dtype is None else out_dtype

    # --- trend folded into an effective bias (tiny O(N*S + S*P) XLA op) ------
    trend = jnp.mean(x.astype(jnp.float32), axis=-1) @ wt.T + bt      # [P], f32
    beff = bs + jnp.pad(trend[None, :], ((0, 0), (0, p_pad - p)))     # [1, Ppad], f32

    # --- row tiling -----------------------------------------------------------
    # Padded rows only produce junk output rows that are sliced off; the trend
    # was computed from the unpadded x, so padding never leaks into results.
    tn, n_pad = _choose_row_tile(n, tile_n, min_grid_steps)
    grid = (n_pad // tn,)
    x_tiled = x if n_pad == n else jnp.pad(x, ((0, n_pad - n), (0, 0)))

    x_bytes = jnp.dtype(x.dtype).itemsize
    w_bytes = jnp.dtype(ws.dtype).itemsize
    o_bytes = jnp.dtype(out_dtype).itemsize

    cost = pl.CostEstimate(
        flops=2 * n_pad * s * p_pad + 2 * n_pad * p_pad,
        bytes_accessed=(x_tiled.size * x_bytes + ws.size * w_bytes
                        + beff.size * 4 + n_pad * p_pad * o_bytes),
        transcendentals=0,
    )

    # VMEM budget derived from actual buffer sizes (every operand is
    # double-buffered by the default pipeline), + ~25% headroom.
    vmem_bytes = (2 * tn * s * x_bytes            # x row tile (streaming)
                  + 2 * s * p_pad * w_bytes       # Ws^T (constant-index, resident)
                  + 2 * 8 * p_pad * 4             # effective bias (sublane-padded)
                  + 2 * tn * p_pad * o_bytes)     # output tile (streaming)
    vmem_limit = max(16 << 20, min(int(vmem_bytes * 1.25) + (2 << 20), 64 << 20))

    out_padded = pl.pallas_call(
        _dlinear_kernel,
        out_shape=jax.ShapeDtypeStruct((n_pad, p_pad), out_dtype),
        grid_spec=pltpu.PrefetchScalarGridSpec(
            num_scalar_prefetch=0,
            grid=grid,
            in_specs=[
                pl.BlockSpec((tn, s), lambda i: (i, 0)),      # x, row-tiled
                pl.BlockSpec((s, p_pad), lambda i: (0, 0)),   # Ws^T, VMEM-resident
                pl.BlockSpec((1, p_pad), lambda i: (0, 0)),   # bias + folded trend
            ],
            out_specs=pl.BlockSpec((tn, p_pad), lambda i: (i, 0)),
        ),
        compiler_params=pltpu.CompilerParams(
            dimension_semantics=("parallel",),
            vmem_limit_bytes=vmem_limit,
        ),
        cost_estimate=cost,
    )(x_tiled, ws, beff)

    return out_padded[:n, :pred_len]


def dlinear_forward(x, w_trend, b_trend, w_seasonal, b_seasonal,
                    *, tile_n=512, compute_dtype=jnp.bfloat16):
    """Convenience one-shot wrapper (prep + apply). For repeated inference,
    call prepare_dlinear_params once and reuse the result with dlinear_apply."""
    params, p = prepare_dlinear_params(
        w_trend, b_trend, w_seasonal, b_seasonal, compute_dtype=compute_dtype)
    return dlinear_apply(x, params, p, tile_n=tile_n)


def dlinear_reference(x, w_trend, b_trend, w_seasonal, b_seasonal):
    """Pure-JAX replica of the PyTorch forward (for verification)."""
    mean = jnp.mean(x, axis=-1)                                   # [N]
    trend = mean @ w_trend.T + b_trend                            # [P]
    seasonal = (x - mean[..., None]) @ w_seasonal.T + b_seasonal  # [N, P]
    return trend + seasonal                                       # broadcast over rows


if __name__ == "__main__":
    # Small shapes consistent with the module: input_dim == seq_len == 8, pred_len = 16.
    seq_len = 8
    input_dim = seq_len
    pred_len = 16

    key = jax.random.PRNGKey(0)
    kx, kwt, kbt, kws, kbs = jax.random.split(key, 5)

    x = jax.random.normal(kx, (input_dim, seq_len), dtype=jnp.float32)

    # Deterministic parameter init mimicking nn.Linear (uniform in +/- 1/sqrt(in)).
    bound = 1.0 / (seq_len ** 0.5)
    w_trend = jax.random.uniform(kwt, (pred_len, seq_len), jnp.float32, -bound, bound)
    b_trend = jax.random.uniform(kbt, (pred_len,), jnp.float32, -bound, bound)
    w_seasonal = jax.random.uniform(kws, (pred_len, seq_len), jnp.float32, -bound, bound)
    b_seasonal = jax.random.uniform(kbs, (pred_len,), jnp.float32, -bound, bound)

    ref = dlinear_reference(x, w_trend, b_trend, w_seasonal, b_seasonal)

    # Exact f32 GEMM path (tight tolerance).
    params_f32, p_out = prepare_dlinear_params(
        w_trend, b_trend, w_seasonal, b_seasonal, compute_dtype=jnp.float32)
    fwd = jax.jit(functools.partial(dlinear_apply, pred_len=p_out))
    out_f32 = jax.block_until_ready(fwd(x, params_f32))
    assert out_f32.shape == (input_dim, pred_len)
    assert jnp.allclose(out_f32, ref, atol=1e-5, rtol=1e-5), "f32 mismatch vs reference"

    # Default bf16-GEMM-operand path (f32 accumulation) -- looser tolerance.
    params_bf16, _ = prepare_dlinear_params(w_trend, b_trend, w_seasonal, b_seasonal)
    out_bf16 = jax.block_until_ready(fwd(x, params_bf16))
    assert out_bf16.shape == (input_dim, pred_len)
    assert jnp.allclose(out_bf16, ref, atol=3e-2, rtol=3e-2), "bf16 mismatch vs reference"

    print("KERNEL_OK")
</pallas_src>

<mosaic_0001>
module attributes {stable_mosaic.version = 11 : i64} {
  func.func @_dlinear_kernel(%arg0: i32, %arg1: memref<8x8xf32, #tpu.memory_space<vmem>>, %arg2: memref<8x128xf32, #tpu.memory_space<vmem>>, %arg3: memref<1x128xf32, #tpu.memory_space<vmem>>, %arg4: memref<8x128xf32, #tpu.memory_space<vmem>>) attributes {dimension_semantics = [#tpu.dimension_semantics<parallel>], iteration_bounds = array<i64: 1>, scalar_prefetch = 0 : i64, scratch_operands = 0 : i64, tpu.core_type = #tpu.core_type<tc>, window_params = [{transform_indices = @transform_0, window_bounds = array<i64: 8, 8>}, {pipeline_mode = #tpu.pipeline_mode<synchronous>, transform_indices = @transform_1, window_bounds = array<i64: 8, 128>}, {pipeline_mode = #tpu.pipeline_mode<synchronous>, transform_indices = @transform_2, window_bounds = array<i64: 1, 128>}, {transform_indices = @transform_3, window_bounds = array<i64: 8, 128>}]} {
    %c0 = arith.constant 0 : index
    %c0_0 = arith.constant 0 : index
    %0 = vector.load %arg1[%c0, %c0_0] : memref<8x8xf32, #tpu.memory_space<vmem>>, vector<8x8xf32>
    %cst = arith.constant dense<0.000000e+00> : vector<8xf32>
    %1 = vector.multi_reduction <add>, %0, %cst [1] : vector<8x8xf32> to vector<8xf32>
    %2 = vector.shape_cast %1 : vector<8xf32> to vector<8x1xf32>
    %cst_1 = arith.constant 8.000000e+00 : f32
    %3 = vector.broadcast %cst_1 : f32 to vector<8x1xf32>
    %4 = arith.divf %2, %3 : vector<8x1xf32>
    %5 = vector.broadcast %4 : vector<8x1xf32> to vector<8x8xf32>
    %6 = arith.subf %0, %5 : vector<8x8xf32>
    %c0_2 = arith.constant 0 : index
    %c0_3 = arith.constant 0 : index
    %7 = vector.load %arg2[%c0_2, %c0_3] : memref<8x128xf32, #tpu.memory_space<vmem>>, vector<8x128xf32>
    %cst_4 = arith.constant dense<0.000000e+00> : vector<8x128xf32>
    %8 = tpu.matmul %6, %7, %cst_4 {dimension_numbers = #tpu.dot_dimension_numbers<[1], [0], [0], [1], [0, 0, 1, 1], [], []>} : vector<8x8xf32>, vector<8x128xf32>, vector<8x128xf32> -> vector<8x128xf32>
    %c0_5 = arith.constant 0 : index
    %c0_6 = arith.constant 0 : index
    %9 = vector.load %arg3[%c0_5, %c0_6] : memref<1x128xf32, #tpu.memory_space<vmem>>, vector<1x128xf32>
    %10 = vector.broadcast %9 : vector<1x128xf32> to vector<8x128xf32>
    %11 = arith.addf %8, %10 : vector<8x128xf32>
    %c0_7 = arith.constant 0 : index
    %c0_8 = arith.constant 0 : index
    %12 = vector.load %arg4[%c0_7, %c0_8] : memref<8x128xf32, #tpu.memory_space<vmem>>, vector<8x128xf32>
    tpu.vector_store %arg4[%c0_7, %c0_8], %11 {strides = array<i32>} : memref<8x128xf32, #tpu.memory_space<vmem>>, vector<8x128xf32>,
    return
  }
  func.func @transform_0(%arg0: i32) -> (i32, i32) {
    %c0_i32 = arith.constant 0 : i32
    %c0_i32_0 = arith.constant 0 : i32
    return %arg0, %c0_i32 : i32, i32
  }
  func.func @transform_1(%arg0: i32) -> (i32, i32) {
    %c0_i32 = arith.constant 0 : i32
    %c0_i32_0 = arith.constant 0 : i32
    %c0_i32_1 = arith.constant 0 : i32
    return %c0_i32, %c0_i32_0 : i32, i32
  }
  func.func @transform_2(%arg0: i32) -> (i32, i32) {
    %c0_i32 = arith.constant 0 : i32
    %c0_i32_0 = arith.constant 0 : i32
    %c0_i32_1 = arith.constant 0 : i32
    return %c0_i32, %c0_i32_0 : i32, i32
  }
  func.func @transform_3(%arg0: i32) -> (i32, i32) {
    %c0_i32 = arith.constant 0 : i32
    %c0_i32_0 = arith.constant 0 : i32
    return %arg0, %c0_i32 : i32, i32
  }
}

</mosaic_0001>

<llo_original>
// kernel: dlinear_apply.1
$region0: #{dlinear_apply.1}
  #allocation0 [shape = 'u32[]', space=smem, size = 0x4, offset = 0x4, fixed_abs, tag = 'smem constant byte address 0x4 - core index']
  #allocation1 [shape = 'u32[144,128]{1,0:T(1,128)}', space=vmem, size = 0x12000, scoped, tag = 'internal scratch']
  %s0 = inlined_call_operand.vmem [shape: f32[8,8], index: 0, kind: input, shape index: {}]
  %s1 = inlined_call_operand.vmem [shape: f32[8,128], index: 1, kind: input, shape index: {}]
  %s2 = inlined_call_operand.vmem [shape: f32[1,128], index: 2, kind: input, shape index: {}]
  %s3 = inlined_call_operand.hbm [shape: f32[8,128], index: 3, kind: output, shape index: {}]
  %s4 = sld [smem:[#allocation0]]
  $region22: #{dlinear_apply.1} parent=0
    _
  %s6 = ssub.s32 1, %s4
  %s7 = scalar_select 0, %s6, %s4
  $region1: #{dlinear_apply.1} parent=0
    #allocation2 [shape = 'u8[4096]{0}', space=vmem, size = 0x1000, scoped, tag = 'output window, operand 0, single buffered']
    #allocation3 [shape = 's32[1]{0}', space=sflag, size = 0x4, scoped, tag = 'scoped memory for dlinear_apply.1']
    %8 = vsyncpa [#allocation3], 0
    // Predicated region
    $region2: #{dlinear_apply.1} parent=1 // pred_check
      _
    $region3: #{dlinear_apply.1} parent=1 // pred_check_branch
      %10 = sbr.rel (0) target = $region5
    $region4: #{dlinear_apply.1} parent=1 // pred_region
      _
    $region5: #{dlinear_apply.1} parent=1 // pred_fallthru
      _
    // Predicated region
    $region6: #{dlinear_apply.1} parent=1 // pred_check
      _
    $region7: #{dlinear_apply.1} parent=1 // pred_check_branch
      %12 = sbr.rel (0) target = $region9
    $region8: #{dlinear_apply.1} parent=1 // pred_region
      _
    $region9: #{dlinear_apply.1} parent=1 // pred_fallthru
      _
    // Predicated region
    $region10: #{dlinear_apply.1} parent=1 // pred_check
      _
    $region11: #{dlinear_apply.1} parent=1 // pred_check_branch
      %14 = sbr.rel (0) target = $region13
    $region12: #{dlinear_apply.1} parent=1 // pred_region
      _
    $region13: #{dlinear_apply.1} parent=1 // pred_fallthru
      _
    %v15 = vld [vmem:[%s0] sm:$0xff]
    %vm16 = vcmask 64512
    %v17 = vsel %vm16, %v15, 0.0
    %18 = vadd.xlane.f32.xlu0 %v17
    %v19 = vpop.xlane.xlu0 %18
    %v20 = vrcp.pop 8.0
    %v21 = vmul.f32 %v19, %v20
    %v22 = vsub.f32 %v15, %v21
    %v23 = vld [vmem:[%s1] sm:$0xff]
    %v24 = vld [vmem:[%s2] sm:$0x1]
    %v26 = vlaneseq
    %v27 = vshrl.u32 %v26, 7
    %v28 = vsub.s32 0, %v27
    %v29 = vrot.slane %v24, %v28
    %v32 = vsel %vm16, %v22, 0
    %34 = vmatprep.subr.mxu0 0.0
    %35 = vmatpush1.msra.mxu0 0.0
    %36 = vmatprep.subr.mxu0 0.0
    %37 = vmatpush1.msra.mxu0 0.0
    %38 = vmatprep.subr.mxu0 0.0
    %39 = vmatpush1.msra.mxu0 0.0
    %40 = vmatprep.subr.mxu0 0.0
    %41 = vmatpush1.msra.mxu0 0.0
    %42 = vmatprep.subr.mxu0 0.0
    %43 = vmatpush1.msra.mxu0 0.0
    %44 = vmatprep.subr.mxu0 0.0
    %45 = vmatpush1.msra.mxu0 0.0
    %46 = vmatprep.subr.mxu0 0.0
    %47 = vmatpush1.msra.mxu0 0.0
    %48 = vmatprep.subr.mxu0 0.0
    %49 = vmatpush1.msra.mxu0 0.0
    %50 = vmatprep.subr.mxu0 0.0
    %51 = vmatpush1.msra.mxu0 0.0
    %52 = vmatprep.subr.mxu0 0.0
    %53 = vmatpush1.msra.mxu0 0.0
    %54 = vmatprep.subr.mxu0 0.0
    %55 = vmatpush1.msra.mxu0 0.0
    %56 = vmatprep.subr.mxu0 0.0
    %57 = vmatpush1.msra.mxu0 0.0
    %58 = vmatprep.subr.mxu0 0.0
    %59 = vmatpush1.msra.mxu0 0.0
    %60 = vmatprep.subr.mxu0 0.0
    %61 = vmatpush1.msra.mxu0 0.0
    %62 = vmatprep.subr.mxu0 0.0
    %63 = vmatpush1.msra.mxu0 0.0
    %64 = vmatprep.subr.mxu0 0.0
    %65 = vmatpush1.msra.mxu0 %v23
    %66 = vmatprep.subr.mxu0 0.0
    %67 = vmatpush2.msra.mxu0 0.0
    %68 = vmatprep.subr.mxu0 0.0
    %69 = vmatpush2.msra.mxu0 0.0
    %70 = vmatprep.subr.mxu0 0.0
    %71 = vmatpush2.msra.mxu0 0.0
    %72 = vmatprep.subr.mxu0 0.0
    %73 = vmatpush2.msra.mxu0 0.0
    %74 = vmatprep.subr.mxu0 0.0
    %75 = vmatpush2.msra.mxu0 0.0
    %76 = vmatprep.subr.mxu0 0.0
    %77 = vmatpush2.msra.mxu0 0.0
    %78 = vmatprep.subr.mxu0 0.0
    %79 = vmatpush2.msra.mxu0 0.0
    %80 = vmatprep.subr.mxu0 0.0
    %81 = vmatpush2.msra.mxu0 0.0
    %82 = vmatprep.subr.mxu0 0.0
    %83 = vmatpush2.msra.mxu0 0.0
    %84 = vmatprep.subr.mxu0 0.0
    %85 = vmatpush2.msra.mxu0 0.0
    %86 = vmatprep.subr.mxu0 0.0
    %87 = vmatpush2.msra.mxu0 0.0
    %88 = vmatprep.subr.mxu0 0.0
    %89 = vmatpush2.msra.mxu0 0.0
    %90 = vmatprep.subr.mxu0 0.0
    %91 = vmatpush2.msra.mxu0 0.0
    %92 = vmatprep.subr.mxu0 0.0
    %93 = vmatpush2.msra.mxu0 0.0
    %94 = vmatprep.subr.mxu0 0.0
    %95 = vmatpush2.msra.mxu0 0.0
    %96 = vmatprep.subr.mxu0 0.0
    %97 = vmatpush2.msra.mxu0 0.0
    %98 = vmatprep.mubr.f32.mxu0 0.0
    %99 = vmatmul.mubr.f32.gmra.mxu0 %v32
    %v100 = vpop.f32.mrf.mxu0
    %v101 = vadd.f32 %v29, %v100
    %v102 = vpop.f32.mrf.mxu0
    %103 = vdwg.mxu0
    %104 = vst [vmem:[#allocation2] sm:$0xff] %v101
    // Predicated region
    $region14: #{dlinear_apply.1} parent=1 // pred_check
      _
    $region15: #{dlinear_apply.1} parent=1 // pred_check_branch
      %106 = sbr.rel (0) target = $region17
    $region16: #{dlinear_apply.1} parent=1 // pred_region
      %s108 = ssub.s32 128, 128
      %109 = vsyncadd [#allocation3], %s108
      %s111 = sshll.u32 [#allocation2], 4
      %s112 = int_to_ptr.vmem [resolvable:$true] %s111
      %114 = dma.vmem_to_hbm [thread:$0]  %s112, 128, %s3, [#allocation3]
    $region17: #{dlinear_apply.1} parent=1 // pred_fallthru
      _
    // Predicated region
    $region18: #{dlinear_apply.1} parent=1 // pred_check
      _
    $region19: #{dlinear_apply.1} parent=1 // pred_check_branch
      %116 = sbr.rel (0) target = $region21
    $region20: #{dlinear_apply.1} parent=1 // pred_region
      %117 = dma.done [#allocation3], 128
    $region21: #{dlinear_apply.1} parent=1 // pred_fallthru
      _
    %118 = vsyncpa [#allocation3], 1

</llo_original>
